<compile_context>
chip_gen: v7x
topology: tpu7x:2x2x1
jax: 0.10.0
libtpu: 0.0.40
codegen_flags: <defaults>
</compile_context>

<pallas_src>
from functools import partial

import jax
import jax.numpy as jnp
from jax.experimental import pallas as pl
from jax.experimental.pallas import tpu as pltpu


def _lambda_kernel(func, x_ref, o_ref):
    # Apply the wrapped function to the current VMEM tile (VPU elementwise).
    # The last grid block may be ragged: reads past the array end see garbage,
    # but those output rows are masked on store, so func(garbage) (even NaN/Inf
    # for log / 1/x style funcs) never reaches HBM.
    o_ref[...] = func(x_ref[...]).astype(o_ref.dtype)


def _auto_block_bytes():
    """Per-generation input-block target.

    v7x (64 MiB VMEM, ~3.2 TB/s HBM) wants ~8 MiB blocks so the ~0.35 us fixed
    per-grid-step overhead stays <10% of a step; v5e/v6e (128 MiB VMEM, lower
    HBM BW) are happy at 4 MiB.  Falls back to 4 MiB if the query fails.
    """
    try:
        vmem = pltpu.get_tpu_info().vmem_capacity_bytes
    except Exception:
        vmem = 128 * 1024 * 1024
    return (8 << 20) if vmem <= (64 << 20) else (4 << 20)


def _make_in_spec(tile_rows, lane_w, n_tiles):
    """Input BlockSpec; triple-buffer the input DMA on longer grids (the body is
    ~zero compute, so the pipeline is pure DMA and an extra buffer hides HBM
    latency jitter at step boundaries)."""
    index_map = lambda i: (i, 0)
    if n_tiles >= 3 and hasattr(pl, "Buffered"):
        try:
            return pl.BlockSpec((tile_rows, lane_w), index_map,
                                pipeline_mode=pl.Buffered(3))
        except TypeError:  # older jax without pipeline_mode= — plain double-buffer
            pass
    return pl.BlockSpec((tile_rows, lane_w), index_map)


def pallas_lambda(func, x, out_dtype=None, *, min_pallas_bytes=2 * 1024 * 1024,
                  block_bytes=None, donate_input=False):
    """Pallas equivalent of Lambda(func).forward(x) == func(x).

    * Elementwise / shape-preserving `func` on arrays whose element count is a
      multiple of 128: tiled Pallas kernel (large lane-dense blocks, copy-free
      reshape, ragged last block masked by Pallas).
    * Shape-changing `func` (torch `.view` style), tiny inputs, or totals not
      divisible by 128: plain JAX (XLA's fused elementwise is already near the
      HBM roofline), identical semantics.

    WARNING: `func` must be strictly elementwise for the Pallas path — tiles
    cross logical row/image boundaries, so reductions would be tile-local.
    `donate_input=True` aliases the output onto the input buffer; only use it
    when the caller does not reuse `x`.
    """
    out_aval = jax.eval_shape(func, jax.ShapeDtypeStruct(x.shape, x.dtype))
    out_dtype = jnp.dtype(out_dtype) if out_dtype is not None else jnp.dtype(out_aval.dtype)

    in_itemsize = x.dtype.itemsize
    out_itemsize = out_dtype.itemsize
    total = x.size
    in_bytes = total * in_itemsize

    # Shape-changing funcs (e.g. x.view(x.size(0), -1)) are metadata-only glue.
    # TODO(synk): no Pallas kernel needed for pure-reshape funcs; plain JAX.
    if out_aval.shape != x.shape:
        return func(x).astype(out_dtype)

    # Bypass: empty / small inputs (launch overhead dominates), or element counts
    # not divisible by 128 (a copy-free lane-dense reshape is impossible; padding
    # would cost full-array copies, so fused XLA is strictly better).
    if total == 0 or in_bytes < min_pallas_bytes or total % 128 != 0:
        return func(x).astype(out_dtype)

    # --- Tiled Pallas path -------------------------------------------------
    # Dtype-aware minimum sublane count: 8 for 4-byte, 16 for 2-byte, 32 for
    # 1-byte dtypes (narrow dtypes pack along sublanes; use the narrower of
    # in/out so stores stay unmasked full vregs).
    min_sub = max(8, 32 // in_itemsize, 32 // out_itemsize)

    # Widest lane-dense width that divides `total` exactly -> the flatten/reshape
    # below is metadata-only (no HBM copy).
    lane_w = 128
    for cand in (512, 256):
        if total % cand == 0 and total // cand >= min_sub:
            lane_w = cand
            break
    rows = total // lane_w

    # Block sizing: ~4 MiB (8 MiB on v7x-like parts) of the wider of in/out dtype.
    target_bytes = block_bytes if block_bytes is not None else _auto_block_bytes()
    target_rows = (target_bytes // max(in_itemsize, out_itemsize)) // lane_w
    target_rows = max(min_sub, (target_rows // min_sub) * min_sub)
    tile_rows = min(rows, target_rows)  # if == rows (full dim), any size is legal

    # Keep >=2 grid steps whenever there is enough data so both v7x TensorCores
    # (and their independent DMA queues) get work.
    # TODO(synk): on v7x, pltpu.CORE_PARALLEL on this axis would guarantee the
    # 2-TC split; kept at "parallel" here for portability across v5e/v6e/v7x.
    if pl.cdiv(rows, tile_rows) < 2 and rows >= 2 * min_sub:
        tile_rows = pl.cdiv(pl.cdiv(rows, 2), min_sub) * min_sub

    n_tiles = pl.cdiv(rows, tile_rows)

    # Guard: func must be cleanly applicable to the 2-D tile shape (it sees
    # (tile_rows, lane_w) inside the kernel, not x.shape).  Otherwise -> XLA.
    try:
        blk_aval = jax.eval_shape(func, jax.ShapeDtypeStruct((tile_rows, lane_w), x.dtype))
        blk_ok = blk_aval.shape == (tile_rows, lane_w)
    except Exception:
        blk_ok = False
    if not blk_ok:
        return func(x).astype(out_dtype)

    # Explicit VMEM budget: (2 or 3)-buffered input + double-buffered output
    # blocks + headroom.  Well under v7x's 64 MiB physical VMEM and v5e/v6e's
    # 128 MiB; raises v5e's 16 MiB scoped default when needed.
    in_blk = tile_rows * lane_w * in_itemsize
    out_blk = tile_rows * lane_w * out_itemsize
    n_in_bufs = 3 if n_tiles >= 3 else 2
    vmem_limit = int(min(max(n_in_bufs * in_blk + 2 * out_blk + (4 << 20), 16 << 20),
                         48 << 20))

    x2 = x.reshape(rows, lane_w)  # contiguous -> metadata-only, no copy

    extra = {}
    if donate_input and out_dtype == x.dtype:
        # Alias output onto the input buffer: halves peak HBM footprint when the
        # caller can donate x (caller must not reuse x afterwards).
        extra["input_output_aliases"] = {0: 0}

    y2 = pl.pallas_call(
        partial(_lambda_kernel, func),
        out_shape=jax.ShapeDtypeStruct((rows, lane_w), out_dtype),
        grid=(n_tiles,),
        in_specs=[_make_in_spec(tile_rows, lane_w, n_tiles)],
        out_specs=pl.BlockSpec((tile_rows, lane_w), lambda i: (i, 0)),
        compiler_params=pltpu.CompilerParams(
            dimension_semantics=("parallel",),
            vmem_limit_bytes=vmem_limit,
        ),
        **extra,
    )(x2)

    return y2.reshape(x.shape)


if __name__ == "__main__":
    key = jax.random.PRNGKey(0)
    N, C, H, W = 2, 4, 16, 16  # NCHW, small shapes consistent with an image pipeline
    x = jax.random.uniform(key, (N, C, H, W), dtype=jnp.float32)  # "pixels" in [0,1]

    # Representative func as used in DCGAN/MNIST: normalize [0,1] -> [-1,1].
    norm = lambda t: t * 2.0 - 1.0

    # 1) Forced Pallas path (demo input is tiny; real-sized inputs above the
    #    bypass threshold take this path automatically).
    y = jax.block_until_ready(pallas_lambda(norm, x, min_pallas_bytes=0))
    assert y.shape == x.shape and y.dtype == x.dtype
    assert jnp.allclose(y, norm(x), atol=1e-6), "elementwise Lambda mismatch (f32)"

    # 2) Ragged grid: rows not a multiple of tile_rows — Pallas masks the last
    #    block (no padding copies anywhere).
    xr = jax.random.normal(jax.random.PRNGKey(2), (2, 4, 16, 160), dtype=jnp.float32)
    yr = jax.block_until_ready(pallas_lambda(jnp.tanh, xr, min_pallas_bytes=0))
    assert yr.shape == xr.shape
    assert jnp.allclose(yr, jnp.tanh(xr), atol=1e-5), "ragged-grid mismatch"

    # 3) Multi-tile grid with triple-buffered input (small block override to
    #    exercise the n_tiles >= 3 path at demo sizes).
    xm = jax.random.normal(jax.random.PRNGKey(3), (2, 4, 32, 160), dtype=jnp.float32)
    ym = jax.block_until_ready(
        pallas_lambda(jnp.tanh, xm, min_pallas_bytes=0, block_bytes=64 * 1024))
    assert jnp.allclose(ym, jnp.tanh(xm), atol=1e-5), "multi-tile mismatch"

    # 4) bf16 input: dtype-aware (16, 128)-packed tiles.
    xb = x.astype(jnp.bfloat16)
    yb = jax.block_until_ready(pallas_lambda(norm, xb, min_pallas_bytes=0))
    assert yb.dtype == jnp.bfloat16
    assert jnp.allclose(yb.astype(jnp.float32), norm(xb).astype(jnp.float32), atol=1e-2)

    # 5) Small-input bypass (default 2 MiB threshold): plain fused XLA.
    ys = jax.block_until_ready(pallas_lambda(norm, x))
    assert jnp.allclose(ys, norm(x), atol=1e-6)

    # 6) Element count not divisible by 128: copy-free lane-dense reshape is
    #    impossible, so we bypass to XLA (identical semantics, no pad copies).
    xa = jax.random.normal(jax.random.PRNGKey(1), (3, 5, 7, 11), dtype=jnp.float32)
    ya = jax.block_until_ready(pallas_lambda(jnp.tanh, xa, min_pallas_bytes=0))
    assert ya.shape == xa.shape
    assert jnp.allclose(ya, jnp.tanh(xa), atol=1e-5), "bypass-path mismatch"

    # 7) Lambda(lambda x: x.view(x.size(0), -1)): shape-changing func is metadata
    #    glue, handled in plain JAX with exact Lambda semantics.
    flat = jax.block_until_ready(
        pallas_lambda(lambda t: t.reshape(t.shape[0], -1), x, min_pallas_bytes=0)
    )
    assert flat.shape == (N, C * H * W)
    assert jnp.allclose(flat, x.reshape(N, -1), atol=0.0)

    print("KERNEL_OK")
</pallas_src>

<mosaic_0001>
module attributes {stable_mosaic.version = 11 : i64} {
  func.func @_lambda_kernel(%arg0: i32, %arg1: memref<8x256xf32, #tpu.memory_space<vmem>>, %arg2: memref<8x256xf32, #tpu.memory_space<vmem>>) attributes {dimension_semantics = [#tpu.dimension_semantics<parallel>], iteration_bounds = array<i64: 1>, scalar_prefetch = 0 : i64, scratch_operands = 0 : i64, tpu.core_type = #tpu.core_type<tc>, window_params = [{transform_indices = @transform_0, window_bounds = array<i64: 8, 256>}, {transform_indices = @transform_1, window_bounds = array<i64: 8, 256>}]} {
    %c0 = arith.constant 0 : index
    %c0_0 = arith.constant 0 : index
    %0 = vector.load %arg1[%c0, %c0_0] : memref<8x256xf32, #tpu.memory_space<vmem>>, vector<8x256xf32>
    %cst = arith.constant 2.000000e+00 : f32
    %1 = vector.broadcast %cst : f32 to vector<8x256xf32>
    %2 = arith.mulf %0, %1 : vector<8x256xf32>
    %cst_1 = arith.constant 1.000000e+00 : f32
    %3 = vector.broadcast %cst_1 : f32 to vector<8x256xf32>
    %4 = arith.subf %2, %3 : vector<8x256xf32>
    %c0_2 = arith.constant 0 : index
    %c0_3 = arith.constant 0 : index
    %5 = vector.load %arg2[%c0_2, %c0_3] : memref<8x256xf32, #tpu.memory_space<vmem>>, vector<8x256xf32>
    tpu.vector_store %arg2[%c0_2, %c0_3], %4 {strides = array<i32>} : memref<8x256xf32, #tpu.memory_space<vmem>>, vector<8x256xf32>,
    return
  }
  func.func @transform_0(%arg0: i32) -> (i32, i32) {
    %c0_i32 = arith.constant 0 : i32
    %c0_i32_0 = arith.constant 0 : i32
    return %arg0, %c0_i32 : i32, i32
  }
  func.func @transform_1(%arg0: i32) -> (i32, i32) {
    %c0_i32 = arith.constant 0 : i32
    %c0_i32_0 = arith.constant 0 : i32
    return %arg0, %c0_i32 : i32, i32
  }
}

</mosaic_0001>

<llo_original>
// kernel: tpu_custom_call.1
$region0: #{tpu_custom_call.1}
  #allocation0 [shape = 'u32[]', space=smem, size = 0x4, offset = 0x4, fixed_abs, tag = 'smem constant byte address 0x4 - core index']
  #allocation1 [shape = 'u32[144,128]{1,0:T(1,128)}', space=vmem, size = 0x12000, scoped, tag = 'internal scratch']
  %s0 = inlined_call_operand.hbm [shape: f32[8,256], index: 0, kind: input, shape index: {}]
  %s1 = inlined_call_operand.hbm [shape: f32[8,256], index: 1, kind: output, shape index: {}]
  %s2 = sld [smem:[#allocation0]]
  $region18: #{tpu_custom_call.1} parent=0
    _
  %s4 = ssub.s32 1, %s2
  %s5 = scalar_select 0, %s4, %s2
  $region1: #{tpu_custom_call.1} parent=0
    #allocation2 [shape = 'u8[8192]{0}', space=vmem, size = 0x2000, scoped, tag = 'input window, operand 0, single buffered']
    #allocation3 [shape = 's32[1]{0}', space=sflag, size = 0x4, scoped, tag = 'scoped memory for tpu_custom_call.1']
    #allocation4 [shape = 's32[1]{0}', space=sflag, size = 0x4, scoped, tag = 'scoped memory for tpu_custom_call.1']
    #allocation5 [shape = 'u8[8192]{0}', space=vmem, size = 0x2000, scoped, tag = 'output window, operand 0, single buffered']
    %6 = vsyncpa [#allocation3], 0
    %7 = vsyncpa [#allocation4], 0
    // Predicated region
    $region2: #{tpu_custom_call.1} parent=1 // pred_check
      _
    $region3: #{tpu_custom_call.1} parent=1 // pred_check_branch
      %9 = sbr.rel (0) target = $region5
    $region4: #{tpu_custom_call.1} parent=1 // pred_region
      %s11 = ssub.s32 256, 256
      %12 = vsyncadd [#allocation3], %s11
      %s14 = sshll.u32 [#allocation2], 4
      %s15 = int_to_ptr.vmem [resolvable:$true] %s14
      %17 = dma.hbm_to_vmem [thread:$0]  %s0, 256, %s15, [#allocation3]
    $region5: #{tpu_custom_call.1} parent=1 // pred_fallthru
      _
    // Predicated region
    $region6: #{tpu_custom_call.1} parent=1 // pred_check
      _
    $region7: #{tpu_custom_call.1} parent=1 // pred_check_branch
      %19 = sbr.rel (0) target = $region9
    $region8: #{tpu_custom_call.1} parent=1 // pred_region
      %20 = dma.done [#allocation3], 256
    $region9: #{tpu_custom_call.1} parent=1 // pred_fallthru
      _
    %v21 = vld [vmem:[#allocation2] sm:$0xff]
    %v22 = vld [vmem:[#allocation2 + $0x8] sm:$0xff]
    %v23 = vmul.f32 %v21, 2.0
    %v24 = vmul.f32 %v22, 2.0
    %v25 = vsub.f32 %v23, 1.0
    %v26 = vsub.f32 %v24, 1.0
    %27 = vst [vmem:[#allocation5] sm:$0xff] %v25
    %28 = vst [vmem:[#allocation5 + $0x8] sm:$0xff] %v26
    // Predicated region
    $region10: #{tpu_custom_call.1} parent=1 // pred_check
      _
    $region11: #{tpu_custom_call.1} parent=1 // pred_check_branch
      %30 = sbr.rel (0) target = $region13
    $region12: #{tpu_custom_call.1} parent=1 // pred_region
      %s32 = ssub.s32 256, 256
      %33 = vsyncadd [#allocation4], %s32
      %s35 = sshll.u32 [#allocation5], 4
      %s36 = int_to_ptr.vmem [resolvable:$true] %s35
      %38 = dma.vmem_to_hbm [thread:$0]  %s36, 256, %s1, [#allocation4]
    $region13: #{tpu_custom_call.1} parent=1 // pred_fallthru
      _
    // Predicated region
    $region14: #{tpu_custom_call.1} parent=1 // pred_check
      _
    $region15: #{tpu_custom_call.1} parent=1 // pred_check_branch
      %40 = sbr.rel (0) target = $region17
    $region16: #{tpu_custom_call.1} parent=1 // pred_region
      %41 = dma.done [#allocation4], 256
    $region17: #{tpu_custom_call.1} parent=1 // pred_fallthru
      _
    %42 = vsyncpa [#allocation3], 1
    %43 = vsyncpa [#allocation4], 1

</llo_original>
